<compile_context>
chip_gen: v7x
topology: tpu7x:2x2x1
jax: 0.10.0
libtpu: 0.0.40
codegen_flags: <defaults>
</compile_context>

<pallas_src>
import functools
import math

import jax
import jax.numpy as jnp
from jax.experimental import pallas as pl
from jax.experimental.pallas import tpu as pltpu

PAD = 0
MAX_SEQ_SIZE = 64

_LANE = 128
_SUBLANE = 8
_MAX_TOKEN_TILE = 32   # rows gathered per grid step (== #DMA semaphores)


def _round_up(x, m):
    return (x + m - 1) // m * m


def _pick_token_tile(s_pad):
    for cand in (_MAX_TOKEN_TILE, 16, 8):
        if cand <= s_pad and s_pad % cand == 0:
            return cand
    return s_pad  # s_pad is always a multiple of 8, so this is unreachable


def _gather_rows(ids_ref, table_hbm, gather_buf, sems, *, base, tok_tile):
    """Issue one row-gather DMA per token of the tile, then wait for all.

    All SMEM scalar reads happen before any DMA wait (keeps sst->sld
    forwarding intact), and all DMAs are in flight concurrently.
    """
    for t in range(tok_tile):
        tok = ids_ref[base + t]
        pltpu.make_async_copy(
            table_hbm.at[pl.ds(tok, 1), :],
            gather_buf.at[pl.ds(t, 1), :],
            sems.at[t],
        ).start()
    for t in range(tok_tile):
        pltpu.make_async_copy(
            table_hbm.at[pl.ds(0, 1), :],          # src irrelevant for wait
            gather_buf.at[pl.ds(t, 1), :],
            sems.at[t],
        ).wait()


def _embed_pe_kernel(ids_ref, table_hbm, pe_ref, w_ref, wp_ref,
                     gather_buf, sems, *, scale, seq_len, tok_tile):
    """Gather rows, write raw embedding and scale*emb + PE (VPU only)."""
    b = pl.program_id(0)
    s_blk = pl.program_id(1)
    base = b * seq_len + s_blk * tok_tile
    _gather_rows(ids_ref, table_hbm, gather_buf, sems,
                 base=base, tok_tile=tok_tile)
    emb = gather_buf[...]                               # (tok_tile, E_pad) f32
    w_ref[...] = emb.astype(w_ref.dtype)
    wp_ref[...] = (emb * scale + pe_ref[...]).astype(wp_ref.dtype)


def _embed_kernel(ids_ref, table_hbm, w_ref, gather_buf, sems,
                  *, seq_len, tok_tile):
    """Gather rows, write the raw embedding only (no PE path)."""
    b = pl.program_id(0)
    s_blk = pl.program_id(1)
    base = b * seq_len + s_blk * tok_tile
    _gather_rows(ids_ref, table_hbm, gather_buf, sems,
                 base=base, tok_tile=tok_tile)
    w_ref[...] = gather_buf[...].astype(w_ref.dtype)


def make_positional_encoding(n_embed, max_len=MAX_SEQ_SIZE):
    position = jnp.arange(0.0, max_len, dtype=jnp.float32)[:, None]       # (L,1)
    div_term = jnp.exp(jnp.arange(0.0, n_embed, 2.0, dtype=jnp.float32)
                       * -(math.log(10000.0) / n_embed))                  # (E/2,)
    pe = jnp.zeros((max_len, n_embed), dtype=jnp.float32)
    pe = pe.at[:, 0::2].set(jnp.sin(position * div_term))
    pe = pe.at[:, 1::2].set(jnp.cos(position * div_term))
    return pe                                                             # (L,E)


def make_word_embedding_params(key, n_vocab, n_embed):
    # nn.init.normal_(weight, mean=0, std=n_embed ** -0.5); weight[PAD] = 0
    table = jax.random.normal(key, (n_vocab, n_embed), dtype=jnp.float32)
    table = table * (n_embed ** -0.5)
    table = table.at[PAD].set(0.0)
    return table


def word_embedding_forward(x, table, pe_buffer=None, *, position_encoding=False):
    """Mirrors WordEmbedding.forward: returns (x_w_emb, x_wp_emb)."""
    B, S = x.shape
    V, E = table.shape

    E_pad = _round_up(E, _LANE)
    S_pad = _round_up(S, _SUBLANE)
    tok_tile = _pick_token_tile(S_pad)

    # Lane-dense embedding dim (unmasked gathers/stores).  In a real module
    # the padded table would be stored once up front, not re-padded per call.
    table_p = table if E_pad == E else jnp.pad(table, ((0, 0), (0, E_pad - E)))
    table_p = table_p.astype(jnp.float32)

    # Token ids -> flat int32 SMEM-prefetch array.  Padded positions use PAD
    # (its table row is zero); they are sliced away after the kernel.
    # Note: out-of-range ids would fault in the gather DMA (like torch's
    # index error), not silently zero-fill.
    ids = x.astype(jnp.int32)
    if S_pad != S:
        ids = jnp.pad(ids, ((0, 0), (0, S_pad - S)), constant_values=PAD)
    ids_flat = ids.reshape(B * S_pad)

    grid = (B, S_pad // tok_tile)
    compiler_params = pltpu.CompilerParams(
        dimension_semantics=("parallel", "parallel"),
        vmem_limit_bytes=32 * 1024 * 1024,
    )
    scratch_shapes = [
        pltpu.VMEM((tok_tile, E_pad), jnp.float32),
        pltpu.SemaphoreType.DMA((tok_tile,)),
    ]
    out_block = pl.BlockSpec((None, tok_tile, E_pad),
                             lambda b, s, ids: (b, s, 0))

    if position_encoding:
        assert pe_buffer is not None
        max_len = pe_buffer.shape[0]
        assert S_pad <= max_len, "sequence longer than positional-encoding buffer"
        pe_p = pe_buffer.astype(jnp.float32)
        if E_pad != E:
            pe_p = jnp.pad(pe_p, ((0, 0), (0, E_pad - E)))
        pe_p = pe_p[:S_pad]                                   # (S_pad, E_pad)

        kernel = functools.partial(_embed_pe_kernel, scale=math.sqrt(E),
                                   seq_len=S_pad, tok_tile=tok_tile)
        w_p, wp_p = pl.pallas_call(
            kernel,
            out_shape=(jax.ShapeDtypeStruct((B, S_pad, E_pad), jnp.float32),
                       jax.ShapeDtypeStruct((B, S_pad, E_pad), jnp.float32)),
            grid_spec=pltpu.PrefetchScalarGridSpec(
                num_scalar_prefetch=1,
                grid=grid,
                in_specs=[
                    pl.BlockSpec(memory_space=pl.ANY),        # table in HBM
                    pl.BlockSpec((tok_tile, E_pad),
                                 lambda b, s, ids: (s, 0)),   # PE seq-tile
                ],
                out_specs=(out_block, out_block),
                scratch_shapes=scratch_shapes,
            ),
            compiler_params=compiler_params,
        )(ids_flat, table_p, pe_p)
        # TODO(synk): emb dropout (train-mode only) not implemented; with
        # emb_dropout=0.0 the PyTorch module disables it anyway.
        return w_p[:, :S, :E], wp_p[:, :S, :E]

    kernel = functools.partial(_embed_kernel, seq_len=S_pad, tok_tile=tok_tile)
    w_p = pl.pallas_call(
        kernel,
        out_shape=jax.ShapeDtypeStruct((B, S_pad, E_pad), jnp.float32),
        grid_spec=pltpu.PrefetchScalarGridSpec(
            num_scalar_prefetch=1,
            grid=grid,
            in_specs=[pl.BlockSpec(memory_space=pl.ANY)],     # table in HBM
            out_specs=out_block,
            scratch_shapes=scratch_shapes,
        ),
        compiler_params=compiler_params,
    )(ids_flat, table_p)
    w = w_p[:, :S, :E]
    # Module returns the same tensor for both outputs when PE is off.
    return w, w


if __name__ == "__main__":
    # Small shapes consistent with the module's forward.
    B, S = 2, 8
    n_vocab, n_embed = 64, 32

    key = jax.random.PRNGKey(0)
    k_table, k_ids = jax.random.split(key)

    table = make_word_embedding_params(k_table, n_vocab, n_embed)
    pe_buffer = make_positional_encoding(n_embed, MAX_SEQ_SIZE)

    # Token ids (include some PAD tokens to exercise padding_idx behavior).
    x = jax.random.randint(k_ids, (B, S), 0, n_vocab, dtype=jnp.int32)
    x = x.at[0, 0].set(PAD)
    x = x.at[1, 3].set(PAD)

    # position_encoding=True path.
    x_w_emb, x_wp_emb = word_embedding_forward(
        x, table, pe_buffer, position_encoding=True)
    jax.block_until_ready((x_w_emb, x_wp_emb))

    # Pure-JAX reference check.
    w_ref = table[x]                                           # (B, S, E)
    wp_ref = w_ref * math.sqrt(n_embed) + pe_buffer[:S][None, :, :]
    assert jnp.allclose(x_w_emb, w_ref, atol=1e-5, rtol=1e-5)
    assert jnp.allclose(x_wp_emb, wp_ref, atol=1e-5, rtol=1e-5)
    assert jnp.allclose(x_w_emb[0, 0], 0.0)                    # PAD row is zero

    # position_encoding=False path (module aliases both outputs).
    w_only, wp_only = word_embedding_forward(x, table, position_encoding=False)
    jax.block_until_ready((w_only, wp_only))
    assert jnp.allclose(w_only, w_ref, atol=1e-5, rtol=1e-5)
    assert jnp.allclose(wp_only, w_ref, atol=1e-5, rtol=1e-5)

    print("KERNEL_OK")
</pallas_src>

<mosaic_0001>
module attributes {stable_mosaic.version = 11 : i64} {
  func.func @_embed_pe_kernel(%arg0: i32, %arg1: i32, %arg2: memref<16xi32, #tpu.memory_space<smem>>, %arg3: memref<64x128xf32, #tpu.memory_space<any>>, %arg4: memref<8x128xf32, #tpu.memory_space<vmem>>, %arg5: memref<1x8x128xf32, #tpu.memory_space<vmem>>, %arg6: memref<1x8x128xf32, #tpu.memory_space<vmem>>, %arg7: memref<8x128xf32, #tpu.memory_space<vmem>>, %arg8: memref<8x!tpu.dma_semaphore, #tpu.memory_space<semaphore_mem>>) attributes {dimension_semantics = [#tpu.dimension_semantics<parallel>, #tpu.dimension_semantics<parallel>], iteration_bounds = array<i64: 2, 1>, scalar_prefetch = 1 : i64, scratch_operands = 2 : i64, tpu.core_type = #tpu.core_type<tc>, window_params = [{}, {transform_indices = @transform_1, window_bounds = array<i64: 8, 128>}, {transform_indices = @transform_2, window_bounds = array<i64: 1, 8, 128>}, {transform_indices = @transform_3, window_bounds = array<i64: 1, 8, 128>}]} {
    %c8_i32 = arith.constant 8 : i32
    %0 = arith.muli %arg0, %c8_i32 : i32
    %c8_i32_0 = arith.constant 8 : i32
    %1 = arith.muli %arg1, %c8_i32_0 : i32
    %2 = arith.addi %0, %1 : i32
    %c0_i32 = arith.constant 0 : i32
    %3 = arith.addi %2, %c0_i32 : i32
    %4 = arith.index_cast %3 : i32 to index
    %5 = memref.load %arg2[%4] : memref<16xi32, #tpu.memory_space<smem>>
    %c0_i32_1 = arith.constant 0 : i32
    %c0_i32_2 = arith.constant 0 : i32
    %6 = tpu.memref_slice %arg3[%5, %c0_i32_2] : memref<64x128xf32, #tpu.memory_space<any>> -> memref<1x128xf32, #tpu.memory_space<any>>
    %c0_i32_3 = arith.constant 0 : i32
    %c0_i32_4 = arith.constant 0 : i32
    %7 = tpu.memref_slice %arg7[%c0_i32_3, %c0_i32_4] : memref<8x128xf32, #tpu.memory_space<vmem>> -> memref<1x128xf32, #tpu.memory_space<vmem>>
    %8 = tpu.memref_slice %arg8[%c0_i32_1] : memref<8x!tpu.dma_semaphore, #tpu.memory_space<semaphore_mem>> -> memref<1x!tpu.dma_semaphore, #tpu.memory_space<semaphore_mem>>
    %9 = tpu.memref_squeeze %8 : memref<1x!tpu.dma_semaphore, #tpu.memory_space<semaphore_mem>> -> memref<!tpu.dma_semaphore, #tpu.memory_space<semaphore_mem>>
    tpu.enqueue_dma source(%6 : memref<1x128xf32, #tpu.memory_space<any>>) target(%7 : memref<1x128xf32, #tpu.memory_space<vmem>>) target_semaphore(%9 : memref<!tpu.dma_semaphore, #tpu.memory_space<semaphore_mem>>)
    %c1_i32 = arith.constant 1 : i32
    %10 = arith.addi %2, %c1_i32 : i32
    %11 = arith.index_cast %10 : i32 to index
    %12 = memref.load %arg2[%11] : memref<16xi32, #tpu.memory_space<smem>>
    %c1_i32_5 = arith.constant 1 : i32
    %c0_i32_6 = arith.constant 0 : i32
    %13 = tpu.memref_slice %arg3[%12, %c0_i32_6] : memref<64x128xf32, #tpu.memory_space<any>> -> memref<1x128xf32, #tpu.memory_space<any>>
    %c1_i32_7 = arith.constant 1 : i32
    %c0_i32_8 = arith.constant 0 : i32
    %14 = tpu.memref_slice %arg7[%c1_i32_7, %c0_i32_8] : memref<8x128xf32, #tpu.memory_space<vmem>> -> memref<1x128xf32, #tpu.memory_space<vmem>>
    %15 = tpu.memref_slice %arg8[%c1_i32_5] : memref<8x!tpu.dma_semaphore, #tpu.memory_space<semaphore_mem>> -> memref<1x!tpu.dma_semaphore, #tpu.memory_space<semaphore_mem>>
    %16 = tpu.memref_squeeze %15 : memref<1x!tpu.dma_semaphore, #tpu.memory_space<semaphore_mem>> -> memref<!tpu.dma_semaphore, #tpu.memory_space<semaphore_mem>>
    tpu.enqueue_dma source(%13 : memref<1x128xf32, #tpu.memory_space<any>>) target(%14 : memref<1x128xf32, #tpu.memory_space<vmem>>) target_semaphore(%16 : memref<!tpu.dma_semaphore, #tpu.memory_space<semaphore_mem>>)
    %c2_i32 = arith.constant 2 : i32
    %17 = arith.addi %2, %c2_i32 : i32
    %18 = arith.index_cast %17 : i32 to index
    %19 = memref.load %arg2[%18] : memref<16xi32, #tpu.memory_space<smem>>
    %c2_i32_9 = arith.constant 2 : i32
    %c0_i32_10 = arith.constant 0 : i32
    %20 = tpu.memref_slice %arg3[%19, %c0_i32_10] : memref<64x128xf32, #tpu.memory_space<any>> -> memref<1x128xf32, #tpu.memory_space<any>>
    %c2_i32_11 = arith.constant 2 : i32
    %c0_i32_12 = arith.constant 0 : i32
    %21 = tpu.memref_slice %arg7[%c2_i32_11, %c0_i32_12] : memref<8x128xf32, #tpu.memory_space<vmem>> -> memref<1x128xf32, #tpu.memory_space<vmem>>
    %22 = tpu.memref_slice %arg8[%c2_i32_9] : memref<8x!tpu.dma_semaphore, #tpu.memory_space<semaphore_mem>> -> memref<1x!tpu.dma_semaphore, #tpu.memory_space<semaphore_mem>>
    %23 = tpu.memref_squeeze %22 : memref<1x!tpu.dma_semaphore, #tpu.memory_space<semaphore_mem>> -> memref<!tpu.dma_semaphore, #tpu.memory_space<semaphore_mem>>
    tpu.enqueue_dma source(%20 : memref<1x128xf32, #tpu.memory_space<any>>) target(%21 : memref<1x128xf32, #tpu.memory_space<vmem>>) target_semaphore(%23 : memref<!tpu.dma_semaphore, #tpu.memory_space<semaphore_mem>>)
    %c3_i32 = arith.constant 3 : i32
    %24 = arith.addi %2, %c3_i32 : i32
    %25 = arith.index_cast %24 : i32 to index
    %26 = memref.load %arg2[%25] : memref<16xi32, #tpu.memory_space<smem>>
    %c3_i32_13 = arith.constant 3 : i32
    %c0_i32_14 = arith.constant 0 : i32
    %27 = tpu.memref_slice %arg3[%26, %c0_i32_14] : memref<64x128xf32, #tpu.memory_space<any>> -> memref<1x128xf32, #tpu.memory_space<any>>
    %c3_i32_15 = arith.constant 3 : i32
    %c0_i32_16 = arith.constant 0 : i32
    %28 = tpu.memref_slice %arg7[%c3_i32_15, %c0_i32_16] : memref<8x128xf32, #tpu.memory_space<vmem>> -> memref<1x128xf32, #tpu.memory_space<vmem>>
    %29 = tpu.memref_slice %arg8[%c3_i32_13] : memref<8x!tpu.dma_semaphore, #tpu.memory_space<semaphore_mem>> -> memref<1x!tpu.dma_semaphore, #tpu.memory_space<semaphore_mem>>
    %30 = tpu.memref_squeeze %29 : memref<1x!tpu.dma_semaphore, #tpu.memory_space<semaphore_mem>> -> memref<!tpu.dma_semaphore, #tpu.memory_space<semaphore_mem>>
    tpu.enqueue_dma source(%27 : memref<1x128xf32, #tpu.memory_space<any>>) target(%28 : memref<1x128xf32, #tpu.memory_space<vmem>>) target_semaphore(%30 : memref<!tpu.dma_semaphore, #tpu.memory_space<semaphore_mem>>)
    %c4_i32 = arith.constant 4 : i32
    %31 = arith.addi %2, %c4_i32 : i32
    %32 = arith.index_cast %31 : i32 to index
    %33 = memref.load %arg2[%32] : memref<16xi32, #tpu.memory_space<smem>>
    %c4_i32_17 = arith.constant 4 : i32
    %c0_i32_18 = arith.constant 0 : i32
    %34 = tpu.memref_slice %arg3[%33, %c0_i32_18] : memref<64x128xf32, #tpu.memory_space<any>> -> memref<1x128xf32, #tpu.memory_space<any>>
    %c4_i32_19 = arith.constant 4 : i32
    %c0_i32_20 = arith.constant 0 : i32
    %35 = tpu.memref_slice %arg7[%c4_i32_19, %c0_i32_20] : memref<8x128xf32, #tpu.memory_space<vmem>> -> memref<1x128xf32, #tpu.memory_space<vmem>>
    %36 = tpu.memref_slice %arg8[%c4_i32_17] : memref<8x!tpu.dma_semaphore, #tpu.memory_space<semaphore_mem>> -> memref<1x!tpu.dma_semaphore, #tpu.memory_space<semaphore_mem>>
    %37 = tpu.memref_squeeze %36 : memref<1x!tpu.dma_semaphore, #tpu.memory_space<semaphore_mem>> -> memref<!tpu.dma_semaphore, #tpu.memory_space<semaphore_mem>>
    tpu.enqueue_dma source(%34 : memref<1x128xf32, #tpu.memory_space<any>>) target(%35 : memref<1x128xf32, #tpu.memory_space<vmem>>) target_semaphore(%37 : memref<!tpu.dma_semaphore, #tpu.memory_space<semaphore_mem>>)
    %c5_i32 = arith.constant 5 : i32
    %38 = arith.addi %2, %c5_i32 : i32
    %39 = arith.index_cast %38 : i32 to index
    %40 = memref.load %arg2[%39] : memref<16xi32, #tpu.memory_space<smem>>
    %c5_i32_21 = arith.constant 5 : i32
    %c0_i32_22 = arith.constant 0 : i32
    %41 = tpu.memref_slice %arg3[%40, %c0_i32_22] : memref<64x128xf32, #tpu.memory_space<any>> -> memref<1x128xf32, #tpu.memory_space<any>>
    %c5_i32_23 = arith.constant 5 : i32
    %c0_i32_24 = arith.constant 0 : i32
    %42 = tpu.memref_slice %arg7[%c5_i32_23, %c0_i32_24] : memref<8x128xf32, #tpu.memory_space<vmem>> -> memref<1x128xf32, #tpu.memory_space<vmem>>
    %43 = tpu.memref_slice %arg8[%c5_i32_21] : memref<8x!tpu.dma_semaphore, #tpu.memory_space<semaphore_mem>> -> memref<1x!tpu.dma_semaphore, #tpu.memory_space<semaphore_mem>>
    %44 = tpu.memref_squeeze %43 : memref<1x!tpu.dma_semaphore, #tpu.memory_space<semaphore_mem>> -> memref<!tpu.dma_semaphore, #tpu.memory_space<semaphore_mem>>
    tpu.enqueue_dma source(%41 : memref<1x128xf32, #tpu.memory_space<any>>) target(%42 : memref<1x128xf32, #tpu.memory_space<vmem>>) target_semaphore(%44 : memref<!tpu.dma_semaphore, #tpu.memory_space<semaphore_mem>>)
    %c6_i32 = arith.constant 6 : i32
    %45 = arith.addi %2, %c6_i32 : i32
    %46 = arith.index_cast %45 : i32 to index
    %47 = memref.load %arg2[%46] : memref<16xi32, #tpu.memory_space<smem>>
    %c6_i32_25 = arith.constant 6 : i32
    %c0_i32_26 = arith.constant 0 : i32
    %48 = tpu.memref_slice %arg3[%47, %c0_i32_26] : memref<64x128xf32, #tpu.memory_space<any>> -> memref<1x128xf32, #tpu.memory_space<any>>
    %c6_i32_27 = arith.constant 6 : i32
    %c0_i32_28 = arith.constant 0 : i32
    %49 = tpu.memref_slice %arg7[%c6_i32_27, %c0_i32_28] : memref<8x128xf32, #tpu.memory_space<vmem>> -> memref<1x128xf32, #tpu.memory_space<vmem>>
    %50 = tpu.memref_slice %arg8[%c6_i32_25] : memref<8x!tpu.dma_semaphore, #tpu.memory_space<semaphore_mem>> -> memref<1x!tpu.dma_semaphore, #tpu.memory_space<semaphore_mem>>
    %51 = tpu.memref_squeeze %50 : memref<1x!tpu.dma_semaphore, #tpu.memory_space<semaphore_mem>> -> memref<!tpu.dma_semaphore, #tpu.memory_space<semaphore_mem>>
    tpu.enqueue_dma source(%48 : memref<1x128xf32, #tpu.memory_space<any>>) target(%49 : memref<1x128xf32, #tpu.memory_space<vmem>>) target_semaphore(%51 : memref<!tpu.dma_semaphore, #tpu.memory_space<semaphore_mem>>)
    %c7_i32 = arith.constant 7 : i32
    %52 = arith.addi %2, %c7_i32 : i32
    %53 = arith.index_cast %52 : i32 to index
    %54 = memref.load %arg2[%53] : memref<16xi32, #tpu.memory_space<smem>>
    %c7_i32_29 = arith.constant 7 : i32
    %c0_i32_30 = arith.constant 0 : i32
    %55 = tpu.memref_slice %arg3[%54, %c0_i32_30] : memref<64x128xf32, #tpu.memory_space<any>> -> memref<1x128xf32, #tpu.memory_space<any>>
    %c7_i32_31 = arith.constant 7 : i32
    %c0_i32_32 = arith.constant 0 : i32
    %56 = tpu.memref_slice %arg7[%c7_i32_31, %c0_i32_32] : memref<8x128xf32, #tpu.memory_space<vmem>> -> memref<1x128xf32, #tpu.memory_space<vmem>>
    %57 = tpu.memref_slice %arg8[%c7_i32_29] : memref<8x!tpu.dma_semaphore, #tpu.memory_space<semaphore_mem>> -> memref<1x!tpu.dma_semaphore, #tpu.memory_space<semaphore_mem>>
    %58 = tpu.memref_squeeze %57 : memref<1x!tpu.dma_semaphore, #tpu.memory_space<semaphore_mem>> -> memref<!tpu.dma_semaphore, #tpu.memory_space<semaphore_mem>>
    tpu.enqueue_dma source(%55 : memref<1x128xf32, #tpu.memory_space<any>>) target(%56 : memref<1x128xf32, #tpu.memory_space<vmem>>) target_semaphore(%58 : memref<!tpu.dma_semaphore, #tpu.memory_space<semaphore_mem>>)
    %c0_i32_33 = arith.constant 0 : i32
    %c0_i32_34 = arith.constant 0 : i32
    %c0_i32_35 = arith.constant 0 : i32
    %59 = tpu.memref_slice %arg3[%c0_i32_34, %c0_i32_35] : memref<64x128xf32, #tpu.memory_space<any>> -> memref<1x128xf32, #tpu.memory_space<any>>
    %c0_i32_36 = arith.constant 0 : i32
    %c0_i32_37 = arith.constant 0 : i32
    %60 = tpu.memref_slice %arg7[%c0_i32_36, %c0_i32_37] : memref<8x128xf32, #tpu.memory_space<vmem>> -> memref<1x128xf32, #tpu.memory_space<vmem>>
    %61 = tpu.memref_slice %arg8[%c0_i32_33] : memref<8x!tpu.dma_semaphore, #tpu.memory_space<semaphore_mem>> -> memref<1x!tpu.dma_semaphore, #tpu.memory_space<semaphore_mem>>
    %62 = tpu.memref_squeeze %61 : memref<1x!tpu.dma_semaphore, #tpu.memory_space<semaphore_mem>> -> memref<!tpu.dma_semaphore, #tpu.memory_space<semaphore_mem>>
    tpu.wait_dma2 semaphore(%62 : memref<!tpu.dma_semaphore, #tpu.memory_space<semaphore_mem>>) src(%59 : memref<1x128xf32, #tpu.memory_space<any>>) dst(%60 : memref<1x128xf32, #tpu.memory_space<vmem>>)
    %c1_i32_38 = arith.constant 1 : i32
    %c0_i32_39 = arith.constant 0 : i32
    %c0_i32_40 = arith.constant 0 : i32
    %63 = tpu.memref_slice %arg3[%c0_i32_39, %c0_i32_40] : memref<64x128xf32, #tpu.memory_space<any>> -> memref<1x128xf32, #tpu.memory_space<any>>
    %c1_i32_41 = arith.constant 1 : i32
    %c0_i32_42 = arith.constant 0 : i32
    %64 = tpu.memref_slice %arg7[%c1_i32_41, %c0_i32_42] : memref<8x128xf32, #tpu.memory_space<vmem>> -> memref<1x128xf32, #tpu.memory_space<vmem>>
    %65 = tpu.memref_slice %arg8[%c1_i32_38] : memref<8x!tpu.dma_semaphore, #tpu.memory_space<semaphore_mem>> -> memref<1x!tpu.dma_semaphore, #tpu.memory_space<semaphore_mem>>
    %66 = tpu.memref_squeeze %65 : memref<1x!tpu.dma_semaphore, #tpu.memory_space<semaphore_mem>> -> memref<!tpu.dma_semaphore, #tpu.memory_space<semaphore_mem>>
    tpu.wait_dma2 semaphore(%66 : memref<!tpu.dma_semaphore, #tpu.memory_space<semaphore_mem>>) src(%63 : memref<1x128xf32, #tpu.memory_space<any>>) dst(%64 : memref<1x128xf32, #tpu.memory_space<vmem>>)
    %c2_i32_43 = arith.constant 2 : i32
    %c0_i32_44 = arith.constant 0 : i32
    %c0_i32_45 = arith.constant 0 : i32
    %67 = tpu.memref_slice %arg3[%c0_i32_44, %c0_i32_45] : memref<64x128xf32, #tpu.memory_space<any>> -> memref<1x128xf32, #tpu.memory_space<any>>
    %c2_i32_46 = arith.constant 2 : i32
    %c0_i32_47 = arith.constant 0 : i32
    %68 = tpu.memref_slice %arg7[%c2_i32_46, %c0_i32_47] : memref<8x128xf32, #tpu.memory_space<vmem>> -> memref<1x128xf32, #tpu.memory_space<vmem>>
    %69 = tpu.memref_slice %arg8[%c2_i32_43] : memref<8x!tpu.dma_semaphore, #tpu.memory_space<semaphore_mem>> -> memref<1x!tpu.dma_semaphore, #tpu.memory_space<semaphore_mem>>
    %70 = tpu.memref_squeeze %69 : memref<1x!tpu.dma_semaphore, #tpu.memory_space<semaphore_mem>> -> memref<!tpu.dma_semaphore, #tpu.memory_space<semaphore_mem>>
    tpu.wait_dma2 semaphore(%70 : memref<!tpu.dma_semaphore, #tpu.memory_space<semaphore_mem>>) src(%67 : memref<1x128xf32, #tpu.memory_space<any>>) dst(%68 : memref<1x128xf32, #tpu.memory_space<vmem>>)
    %c3_i32_48 = arith.constant 3 : i32
    %c0_i32_49 = arith.constant 0 : i32
    %c0_i32_50 = arith.constant 0 : i32
    %71 = tpu.memref_slice %arg3[%c0_i32_49, %c0_i32_50] : memref<64x128xf32, #tpu.memory_space<any>> -> memref<1x128xf32, #tpu.memory_space<any>>
    %c3_i32_51 = arith.constant 3 : i32
    %c0_i32_52 = arith.constant 0 : i32
    %72 = tpu.memref_slice %arg7[%c3_i32_51, %c0_i32_52] : memref<8x128xf32, #tpu.memory_space<vmem>> -> memref<1x128xf32, #tpu.memory_space<vmem>>
    %73 = tpu.memref_slice %arg8[%c3_i32_48] : memref<8x!tpu.dma_semaphore, #tpu.memory_space<semaphore_mem>> -> memref<1x!tpu.dma_semaphore, #tpu.memory_space<semaphore_mem>>
    %74 = tpu.memref_squeeze %73 : memref<1x!tpu.dma_semaphore, #tpu.memory_space<semaphore_mem>> -> memref<!tpu.dma_semaphore, #tpu.memory_space<semaphore_mem>>
    tpu.wait_dma2 semaphore(%74 : memref<!tpu.dma_semaphore, #tpu.memory_space<semaphore_mem>>) src(%71 : memref<1x128xf32, #tpu.memory_space<any>>) dst(%72 : memref<1x128xf32, #tpu.memory_space<vmem>>)
    %c4_i32_53 = arith.constant 4 : i32
    %c0_i32_54 = arith.constant 0 : i32
    %c0_i32_55 = arith.constant 0 : i32
    %75 = tpu.memref_slice %arg3[%c0_i32_54, %c0_i32_55] : memref<64x128xf32, #tpu.memory_space<any>> -> memref<1x128xf32, #tpu.memory_space<any>>
    %c4_i32_56 = arith.constant 4 : i32
    %c0_i32_57 = arith.constant 0 : i32
    %76 = tpu.memref_slice %arg7[%c4_i32_56, %c0_i32_57] : memref<8x128xf32, #tpu.memory_space<vmem>> -> memref<1x128xf32, #tpu.memory_space<vmem>>
    %77 = tpu.memref_slice %arg8[%c4_i32_53] : memref<8x!tpu.dma_semaphore, #tpu.memory_space<semaphore_mem>> -> memref<1x!tpu.dma_semaphore, #tpu.memory_space<semaphore_mem>>
    %78 = tpu.memref_squeeze %77 : memref<1x!tpu.dma_semaphore, #tpu.memory_space<semaphore_mem>> -> memref<!tpu.dma_semaphore, #tpu.memory_space<semaphore_mem>>
    tpu.wait_dma2 semaphore(%78 : memref<!tpu.dma_semaphore, #tpu.memory_space<semaphore_mem>>) src(%75 : memref<1x128xf32, #tpu.memory_space<any>>) dst(%76 : memref<1x128xf32, #tpu.memory_space<vmem>>)
    %c5_i32_58 = arith.constant 5 : i32
    %c0_i32_59 = arith.constant 0 : i32
    %c0_i32_60 = arith.constant 0 : i32
    %79 = tpu.memref_slice %arg3[%c0_i32_59, %c0_i32_60] : memref<64x128xf32, #tpu.memory_space<any>> -> memref<1x128xf32, #tpu.memory_space<any>>
    %c5_i32_61 = arith.constant 5 : i32
    %c0_i32_62 = arith.constant 0 : i32
    %80 = tpu.memref_slice %arg7[%c5_i32_61, %c0_i32_62] : memref<8x128xf32, #tpu.memory_space<vmem>> -> memref<1x128xf32, #tpu.memory_space<vmem>>
    %81 = tpu.memref_slice %arg8[%c5_i32_58] : memref<8x!tpu.dma_semaphore, #tpu.memory_space<semaphore_mem>> -> memref<1x!tpu.dma_semaphore, #tpu.memory_space<semaphore_mem>>
    %82 = tpu.memref_squeeze %81 : memref<1x!tpu.dma_semaphore, #tpu.memory_space<semaphore_mem>> -> memref<!tpu.dma_semaphore, #tpu.memory_space<semaphore_mem>>
    tpu.wait_dma2 semaphore(%82 : memref<!tpu.dma_semaphore, #tpu.memory_space<semaphore_mem>>) src(%79 : memref<1x128xf32, #tpu.memory_space<any>>) dst(%80 : memref<1x128xf32, #tpu.memory_space<vmem>>)
    %c6_i32_63 = arith.constant 6 : i32
    %c0_i32_64 = arith.constant 0 : i32
    %c0_i32_65 = arith.constant 0 : i32
    %83 = tpu.memref_slice %arg3[%c0_i32_64, %c0_i32_65] : memref<64x128xf32, #tpu.memory_space<any>> -> memref<1x128xf32, #tpu.memory_space<any>>
    %c6_i32_66 = arith.constant 6 : i32
    %c0_i32_67 = arith.constant 0 : i32
    %84 = tpu.memref_slice %arg7[%c6_i32_66, %c0_i32_67] : memref<8x128xf32, #tpu.memory_space<vmem>> -> memref<1x128xf32, #tpu.memory_space<vmem>>
    %85 = tpu.memref_slice %arg8[%c6_i32_63] : memref<8x!tpu.dma_semaphore, #tpu.memory_space<semaphore_mem>> -> memref<1x!tpu.dma_semaphore, #tpu.memory_space<semaphore_mem>>
    %86 = tpu.memref_squeeze %85 : memref<1x!tpu.dma_semaphore, #tpu.memory_space<semaphore_mem>> -> memref<!tpu.dma_semaphore, #tpu.memory_space<semaphore_mem>>
    tpu.wait_dma2 semaphore(%86 : memref<!tpu.dma_semaphore, #tpu.memory_space<semaphore_mem>>) src(%83 : memref<1x128xf32, #tpu.memory_space<any>>) dst(%84 : memref<1x128xf32, #tpu.memory_space<vmem>>)
    %c7_i32_68 = arith.constant 7 : i32
    %c0_i32_69 = arith.constant 0 : i32
    %c0_i32_70 = arith.constant 0 : i32
    %87 = tpu.memref_slice %arg3[%c0_i32_69, %c0_i32_70] : memref<64x128xf32, #tpu.memory_space<any>> -> memref<1x128xf32, #tpu.memory_space<any>>
    %c7_i32_71 = arith.constant 7 : i32
    %c0_i32_72 = arith.constant 0 : i32
    %88 = tpu.memref_slice %arg7[%c7_i32_71, %c0_i32_72] : memref<8x128xf32, #tpu.memory_space<vmem>> -> memref<1x128xf32, #tpu.memory_space<vmem>>
    %89 = tpu.memref_slice %arg8[%c7_i32_68] : memref<8x!tpu.dma_semaphore, #tpu.memory_space<semaphore_mem>> -> memref<1x!tpu.dma_semaphore, #tpu.memory_space<semaphore_mem>>
    %90 = tpu.memref_squeeze %89 : memref<1x!tpu.dma_semaphore, #tpu.memory_space<semaphore_mem>> -> memref<!tpu.dma_semaphore, #tpu.memory_space<semaphore_mem>>
    tpu.wait_dma2 semaphore(%90 : memref<!tpu.dma_semaphore, #tpu.memory_space<semaphore_mem>>) src(%87 : memref<1x128xf32, #tpu.memory_space<any>>) dst(%88 : memref<1x128xf32, #tpu.memory_space<vmem>>)
    %c0 = arith.constant 0 : index
    %c0_73 = arith.constant 0 : index
    %91 = vector.load %arg7[%c0, %c0_73] : memref<8x128xf32, #tpu.memory_space<vmem>>, vector<8x128xf32>
    %c0_74 = arith.constant 0 : index
    %c0_75 = arith.constant 0 : index
    %c0_76 = arith.constant 0 : index
    %92 = vector.load %arg5[%c0_74, %c0_75, %c0_76] : memref<1x8x128xf32, #tpu.memory_space<vmem>>, vector<1x8x128xf32>
    %93 = vector.shape_cast %92 : vector<1x8x128xf32> to vector<8x128xf32>
    %94 = vector.shape_cast %91 : vector<8x128xf32> to vector<1x8x128xf32>
    tpu.vector_store %arg5[%c0_74, %c0_75, %c0_76], %94 {strides = array<i32>} : memref<1x8x128xf32, #tpu.memory_space<vmem>>, vector<1x8x128xf32>,
    %cst = arith.constant 5.65685415 : f32
    %95 = vector.broadcast %cst : f32 to vector<8x128xf32>
    %96 = arith.mulf %91, %95 : vector<8x128xf32>
    %c0_77 = arith.constant 0 : index
    %c0_78 = arith.constant 0 : index
    %97 = vector.load %arg4[%c0_77, %c0_78] : memref<8x128xf32, #tpu.memory_space<vmem>>, vector<8x128xf32>
    %98 = arith.addf %96, %97 : vector<8x128xf32>
    %c0_79 = arith.constant 0 : index
    %c0_80 = arith.constant 0 : index
    %c0_81 = arith.constant 0 : index
    %99 = vector.load %arg6[%c0_79, %c0_80, %c0_81] : memref<1x8x128xf32, #tpu.memory_space<vmem>>, vector<1x8x128xf32>
    %100 = vector.shape_cast %99 : vector<1x8x128xf32> to vector<8x128xf32>
    %101 = vector.shape_cast %98 : vector<8x128xf32> to vector<1x8x128xf32>
    tpu.vector_store %arg6[%c0_79, %c0_80, %c0_81], %101 {strides = array<i32>} : memref<1x8x128xf32, #tpu.memory_space<vmem>>, vector<1x8x128xf32>,
    return
  }
  func.func @transform_1(%arg0: i32, %arg1: i32, %arg2: memref<16xi32, #tpu.memory_space<smem>>) -> (i32, i32) {
    %c0_i32 = arith.constant 0 : i32
    %c0_i32_0 = arith.constant 0 : i32
    return %arg1, %c0_i32 : i32, i32
  }
  func.func @transform_2(%arg0: i32, %arg1: i32, %arg2: memref<16xi32, #tpu.memory_space<smem>>) -> (i32, i32, i32) {
    %c0_i32 = arith.constant 0 : i32
    %c0_i32_0 = arith.constant 0 : i32
    return %arg0, %arg1, %c0_i32 : i32, i32, i32
  }
  func.func @transform_3(%arg0: i32, %arg1: i32, %arg2: memref<16xi32, #tpu.memory_space<smem>>) -> (i32, i32, i32) {
    %c0_i32 = arith.constant 0 : i32
    %c0_i32_0 = arith.constant 0 : i32
    return %arg0, %arg1, %c0_i32 : i32, i32, i32
  }
}

</mosaic_0001>

<llo_original>
// kernel: tpu_custom_call.1
$region0: #{tpu_custom_call.1}
  #allocation0 [shape = 'u32[]', space=smem, size = 0x4, offset = 0x4, fixed_abs, tag = 'smem constant byte address 0x4 - core index']
  #allocation1 [shape = 'u32[144,128]{1,0:T(1,128)}', space=vmem, size = 0x12000, scoped, tag = 'internal scratch']
  #allocation2 [shape = 'f32[8,128]{1,0:T(8,128)}', space=vmem, size = 0x1000, scoped, tag = 'scratch operand']
  #allocation3 [shape = 's32[8]{0}', space=sflag, size = 0x20, scoped, tag = 'scratch operand']
  #allocation4 [shape = 's32[1]{0}', space=sflag, size = 0x4, scoped, tag = 'scoped memory for tpu_custom_call.1']
  #allocation5 [shape = 'u8[512]{0}', space=smem, size = 0x200, scoped, tag = 'prefetched SMEM operand 0']
  #allocation12 [shape = 's32[]', space=sflag, size = 0x4, offset = 0, fixed_abs, tag = 'sflag constant byte address 0x0 - dummy sync flag']
  #allocation13 [shape = 's32[]', space=sflag, size = 0x4, offset = 0, fixed_abs, tag = 'sflag constant byte address 0x0 - dummy sync flag']
  #allocation14 [shape = 'u32[]', space=smem, size = 0x4, offset = 0x44, fixed_abs, tag = 'smem constant byte address 0x44 - assertion arg 0']
  #allocation15 [shape = 'u32[]', space=smem, size = 0x4, offset = 0x48, fixed_abs, tag = 'smem constant byte address 0x48 - assertion arg 1']
  #allocation16 [shape = 's32[]', space=sflag, size = 0x4, offset = 0, fixed_abs, tag = 'sflag constant byte address 0x0 - dummy sync flag']
  #allocation17 [shape = 's32[]', space=sflag, size = 0x4, offset = 0, fixed_abs, tag = 'sflag constant byte address 0x0 - dummy sync flag']
  #allocation18 [shape = 's32[]', space=sflag, size = 0x4, offset = 0, fixed_abs, tag = 'sflag constant byte address 0x0 - dummy sync flag']
  #allocation19 [shape = 's32[]', space=sflag, size = 0x4, offset = 0, fixed_abs, tag = 'sflag constant byte address 0x0 - dummy sync flag']
  #allocation20 [shape = 's32[]', space=sflag, size = 0x4, offset = 0, fixed_abs, tag = 'sflag constant byte address 0x0 - dummy sync flag']
  #allocation21 [shape = 's32[]', space=sflag, size = 0x4, offset = 0, fixed_abs, tag = 'sflag constant byte address 0x0 - dummy sync flag']
  #allocation22 [shape = 's32[]', space=sflag, size = 0x4, offset = 0, fixed_abs, tag = 'sflag constant byte address 0x0 - dummy sync flag']
  #allocation23 [shape = 's32[]', space=sflag, size = 0x4, offset = 0, fixed_abs, tag = 'sflag constant byte address 0x0 - dummy sync flag']
  #allocation24 [shape = 's32[]', space=sflag, size = 0x4, offset = 0, fixed_abs, tag = 'sflag constant byte address 0x0 - dummy sync flag']
  #allocation25 [shape = 's32[]', space=sflag, size = 0x4, offset = 0, fixed_abs, tag = 'sflag constant byte address 0x0 - dummy sync flag']
  #allocation26 [shape = 's32[]', space=sflag, size = 0x4, offset = 0, fixed_abs, tag = 'sflag constant byte address 0x0 - dummy sync flag']
  #allocation27 [shape = 's32[]', space=sflag, size = 0x4, offset = 0, fixed_abs, tag = 'sflag constant byte address 0x0 - dummy sync flag']
  #allocation28 [shape = 's32[]', space=sflag, size = 0x4, offset = 0, fixed_abs, tag = 'sflag constant byte address 0x0 - dummy sync flag']
  #allocation29 [shape = 's32[]', space=sflag, size = 0x4, offset = 0, fixed_abs, tag = 'sflag constant byte address 0x0 - dummy sync flag']
  %s0 = inlined_call_operand.hbm [shape: s32[16], index: 0, kind: input, shape index: {}]
  %s1 = inlined_call_operand.hbm [shape: f32[64,128], index: 1, kind: input, shape index: {}]
  %s2 = inlined_call_operand.hbm [shape: f32[8,128], index: 2, kind: input, shape index: {}]
  %s3 = inlined_call_operand.hbm [shape: f32[2,8,128], index: 3, kind: output, shape index: {0}]
  %s4 = inlined_call_operand.hbm [shape: f32[2,8,128], index: 4, kind: output, shape index: {1}]
  %5 = xla_tuple %s3, %s4
  %s6 = sld [smem:[#allocation0]]
  $region81: #{tpu_custom_call.1} parent=0
    _
  %s8 = ssub.s32 1, %s6
  %s9 = scalar_select 0, %s8, %s6
  %11 = dma.hbm_to_smem %s0, 16, [#allocation5], [#allocation4]
  %12 = dma.done [#allocation4], 16
  %13 = sfence
  $region1: #{tpu_custom_call.1} parent=0
    #allocation6 [shape = 'u8[4096]{0}', space=vmem, size = 0x1000, scoped, tag = 'input window, operand 2, single buffered']
    #allocation7 [shape = 's32[2]{0}', space=sflag, size = 0x8, scoped, tag = 'scoped memory for tpu_custom_call.1']
    #allocation8 [shape = 's32[2]{0}', space=sflag, size = 0x8, scoped, tag = 'scoped memory for tpu_custom_call.1']
    #allocation9 [shape = 'u8[8192]{0}', space=vmem, size = 0x2000, scoped, tag = 'output window, operand 0']
    #allocation10 [shape = 'u8[8192]{0}', space=vmem, size = 0x2000, scoped, tag = 'output window, operand 1']
    #allocation11 [shape = 's32[2]{0}', space=sflag, size = 0x8, scoped, tag = 'scoped memory for tpu_custom_call.1']
    %14 = vsyncpa [#allocation7], 0
    %15 = vsyncpa [#allocation8], 0
    %s16 = scalar_lea.sflag [#allocation8], 1
    %17 = vsyncpa %s16, 0
    %18 = vsyncpa [#allocation11], 0
    %s19 = scalar_lea.sflag [#allocation11], 1
    %20 = vsyncpa %s19, 0
    loop: start=0, step=1, limit=4
    $region2: #{tpu_custom_call.1} parent=1 // loop_pre_header
      _
    $region3: #{tpu_custom_call.1} parent=1 // loop_header
      %s22 = sphi 0, %s26
      %p23 = scmp.ge.s32.totalorder %s22, 4
      %s29 = sphi 0, %s41
      %s30 = sphi 0, %s37
      %s31 = sphi 0, %s29
      %s32 = sphi 0, %s30
      %s33 = sphi 0, %s31
      %s34 = sphi 0, %s32
      %s44 = sphi 0, %s46
      %s47 = sphi 0, %s44
      %s48 = sphi 0, %s47
      %s64 = sphi 0, %s48
      %s72 = sphi 0, %s74
      %s75 = sphi 0, %s72
      %s76 = sphi 0, %s75
      %s92 = sphi 0, %s76
      %s100 = sphi 0, %s102
      %s103 = sphi 0, %s100
      %s104 = sphi 0, %s103
      %s120 = sphi 0, %s104
    $region4: #{tpu_custom_call.1} parent=1 // loop_header_branch
      %25 = sbr.rel (%p23) target = $region8
    $region5: #{tpu_custom_call.1} parent=1 // loop_body
      %s27 = ssub.s32 %s22, 1
      %s28 = ssub.s32 %s22, 2
      %s35 = sadd.s32 1, %s30
      %p36 = scmp.ge.s32.totalorder %s35, 1
      %s37 = scalar_select %p36, 0, %s35
      %s38 = sadd.s32 1, %s29
      %s39 = scalar_select %p36, %s38, %s29
      %p40 = scmp.ge.s32.totalorder %s39, 2
      %s41 = scalar_select %p40, 0, %s39
      %s42 = ssub.s32 %s30, %s37
      %p43 = scmp.eq.s32.totalorder %s42, 0
      %s45 = sadd.s32 %s44, 1
      %s46 = scalar_select %p43, %s44, %s45
      %p49 = pneg %p43
      %p50 = scmp.eq.s32.totalorder %s22, 1
      %p51 = por %p49, %p50
      %p52 = scmp.ne.s32.totalorder %s44, %s47
      %p53 = scmp.eq.s32.totalorder %s22, 0
      %p54 = por %p52, %p53
      %p55 = scmp.ne.s32.totalorder %s44, %s47
      %p56 = scmp.eq.s32.totalorder %s27, 1
      %p57 = por %p55, %p56
      %p58 = scmp.ne.s32.totalorder %s47, %s48
      %p59 = scmp.eq.s32.totalorder %s27, 0
      %p60 = por %p58, %p59
      %p61 = scmp.ne.s32.totalorder %s47, %s48
      %p62 = scmp.eq.s32.totalorder %s28, 1
      %p63 = por %p61, %p62
      %p65 = scmp.ne.s32.totalorder %s48, %s64
      %p66 = scmp.eq.s32.totalorder %s28, 0
      %p67 = por %p65, %p66
      %s68 = ssub.s32 %s29, %s41
      %s69 = ssub.s32 %s30, %s37
      %s70 = sor.u32 %s68, %s69
      %p71 = scmp.eq.s32.totalorder %s70, 0
      %s73 = sadd.s32 %s72, 1
      %s74 = scalar_select %p71, %s72, %s73
      %p77 = pneg %p71
      %p78 = scmp.eq.s32.totalorder %s22, 1
      %p79 = por %p77, %p78
      %p80 = scmp.ne.s32.totalorder %s72, %s75
      %p81 = scmp.eq.s32.totalorder %s22, 0
      %p82 = por %p80, %p81
      %p83 = scmp.ne.s32.totalorder %s72, %s75
      %p84 = scmp.eq.s32.totalorder %s27, 1
      %p85 = por %p83, %p84
      %p86 = scmp.ne.s32.totalorder %s75, %s76
      %p87 = scmp.eq.s32.totalorder %s27, 0
      %p88 = por %p86, %p87
      %p89 = scmp.ne.s32.totalorder %s75, %s76
      %p90 = scmp.eq.s32.totalorder %s28, 1
      %p91 = por %p89, %p90
      %p93 = scmp.ne.s32.totalorder %s76, %s92
      %p94 = scmp.eq.s32.totalorder %s28, 0
      %p95 = por %p93, %p94
      %s96 = ssub.s32 %s29, %s41
      %s97 = ssub.s32 %s30, %s37
      %s98 = sor.u32 %s96, %s97
      %p99 = scmp.eq.s32.totalorder %s98, 0
      %s101 = sadd.s32 %s100, 1
      %s102 = scalar_select %p99, %s100, %s101
      %p105 = pneg %p99
      %p106 = scmp.eq.s32.totalorder %s22, 1
      %p107 = por %p105, %p106
      %p108 = scmp.ne.s32.totalorder %s100, %s103
      %p109 = scmp.eq.s32.totalorder %s22, 0
      %p110 = por %p108, %p109
      %p111 = scmp.ne.s32.totalorder %s100, %s103
      %p112 = scmp.eq.s32.totalorder %s27, 1
      %p113 = por %p111, %p112
      %p114 = scmp.ne.s32.totalorder %s103, %s104
      %p115 = scmp.eq.s32.totalorder %s27, 0
      %p116 = por %p114, %p115
      %p117 = scmp.ne.s32.totalorder %s103, %s104
      %p118 = scmp.eq.s32.totalorder %s28, 1
      %p119 = por %p117, %p118
      %p121 = scmp.ne.s32.totalorder %s104, %s120
      %p122 = scmp.eq.s32.totalorder %s28, 0
      %p123 = por %p121, %p122
      %p124 = scmp.le.s32.totalorder 1, %s22
      %p125 = scmp.lt.s32.totalorder %s22, 3
      %p126 = pnand %p124, %p125
      %p127 = pneg %p126
      // Predicated region
      $region9: #{tpu_custom_call.1} parent=5 // pred_check
        _
      $region10: #{tpu_custom_call.1} parent=5 // pred_check_branch
        %129 = sbr.rel (%p126) target = $region12
      $region11: #{tpu_custom_call.1} parent=5 // pred_region
        %s130 = ssub.s32 %s22, 1
        // Predicated region
        $region13: #{tpu_custom_call.1} parent=11 // pred_check
          %p131 = pneg %p60
        $region14: #{tpu_custom_call.1} parent=11 // pred_check_branch
          %133 = sbr.rel (%p131) target = $region16
        $region15: #{tpu_custom_call.1} parent=11 // pred_region
          %s135 = ssub.s32 128, 128
          %136 = vsyncadd [#allocation7], %s135
          %s137 = smul.addr %s32, 128
          %s138 = scalar_lea.hbm %s2, %s137
          %s140 = sshll.u32 [#allocation6], 4
          %s141 = int_to_ptr.vmem [resolvable:$true] %s140
          %143 = dma.hbm_to_vmem [thread:$0]  %s138, 128, %s141, [#allocation7]
        $region16: #{tpu_custom_call.1} parent=11 // pred_fallthru
          _
      $region12: #{tpu_custom_call.1} parent=5 // pred_fallthru
        _
      %p144 = scmp.lt.s32.totalorder %s22, 2
      // Predicated region
      $region17: #{tpu_custom_call.1} parent=5 // pred_check
        %p145 = pneg %p144
      $region18: #{tpu_custom_call.1} parent=5 // pred_check_branch
        %147 = sbr.rel (%p145) target = $region20
      $region19: #{tpu_custom_call.1} parent=5 // pred_region
        _
      $region20: #{tpu_custom_call.1} parent=5 // pred_fallthru
        _
      %p148 = scmp.le.s32.totalorder 1, %s22
      %p149 = scmp.lt.s32.totalorder %s22, 3
      %p150 = pnand %p148, %p149
      %p151 = pneg %p150
      // Predicated region
      $region21: #{tpu_custom_call.1} parent=5 // pred_check
        _
      $region22: #{tpu_custom_call.1} parent=5 // pred_check_branch
        %153 = sbr.rel (%p150) target = $region24
      $region23: #{tpu_custom_call.1} parent=5 // pred_region
        %s154 = ssub.s32 %s22, 1
        // Predicated region
        $region25: #{tpu_custom_call.1} parent=23 // pred_check
          %p155 = pneg %p60
        $region26: #{tpu_custom_call.1} parent=23 // pred_check_branch
          %157 = sbr.rel (%p155) target = $region28
        $region27: #{tpu_custom_call.1} parent=23 // pred_region
          %158 = dma.done [#allocation7], 128
        $region28: #{tpu_custom_call.1} parent=23 // pred_fallthru
          _
        %p159 = pneg %p60
        %p160 = pneg %p57
        %p161 = pneg %p88
        %p162 = pneg %p85
        %s163 = sand.u32 %s75, 1
        %s164 = scalar_lea.sflag [#allocation8], %s163
        %s165 = sand.u32 %s75, 1
        %s166 = smul.addr %s165, 8
        %s167 = scalar_lea.vmem [#allocation9], %s166
        %p168 = pneg %p116
        %p169 = pneg %p113
        %s170 = sand.u32 %s103, 1
        %s171 = scalar_lea.sflag [#allocation11], %s170
        %s172 = sand.u32 %s103, 1
        %s173 = smul.addr %s172, 8
        %s174 = scalar_lea.vmem [#allocation10], %s173
        %s175 = smul.u32 %s31, 8
        %s176 = smul.u32 %s32, 8
        %s177 = sadd.s32 %s175, %s176
        %s178 = sld [smem:[#allocation5 + %s177]]
        %s179 = smul.addr %s178, 16
        %s180 = scalar_lea.hbm %s1, %s179
        // Predicated region
        $region29: #{tpu_custom_call.1} parent=23 // pred_check
          _
        $region30: #{tpu_custom_call.1} parent=23 // pred_check_branch
          %182 = sbr.rel target = $region32
        $region31: #{tpu_custom_call.1} parent=23 // pred_region
          %183 = sst [smem:[#allocation14]] [#allocation13]
          %184 = sst [smem:[#allocation15]] [#allocation12]
        $region32: #{tpu_custom_call.1} parent=23 // pred_fallthru
          _
        %186 = shalt.err (0)
        %s188 = sshll.u32 [#allocation2], 4
        %s189 = int_to_ptr.vmem [resolvable:$true] %s188
        %191 = dma.hbm_to_vmem [thread:$0]  %s180, 16, %s189, [#allocation3]
        %s192 = sadd.s32 %s177, 1
        %s193 = sld [smem:[#allocation5 + %s192]]
        %s194 = smul.addr %s193, 16
        %s195 = scalar_lea.hbm %s1, %s194
        %s196 = scalar_lea.vmem [#allocation2], 1
        %s197 = scalar_lea.sflag [#allocation3], 1
        // Predicated region
        $region33: #{tpu_custom_call.1} parent=23 // pred_check
          _
        $region34: #{tpu_custom_call.1} parent=23 // pred_check_branch
          %199 = sbr.rel target = $region36
        $region35: #{tpu_custom_call.1} parent=23 // pred_region
          %200 = sst [smem:[#allocation14]] [#allocation17]
          %201 = sst [smem:[#allocation15]] [#allocation16]
        $region36: #{tpu_custom_call.1} parent=23 // pred_fallthru
          _
        %203 = shalt.err (0)
        %s205 = sshll.u32 %s196, 4
        %s206 = int_to_ptr.vmem [resolvable:$true] %s205
        %208 = dma.hbm_to_vmem [thread:$0]  %s195, 16, %s206, %s197
        %s209 = sadd.s32 %s177, 2
        %s210 = sld [smem:[#allocation5 + %s209]]
        %s211 = smul.addr %s210, 16
        %s212 = scalar_lea.hbm %s1, %s211
        %s213 = scalar_lea.vmem [#allocation2], 2
        %s214 = scalar_lea.sflag [#allocation3], 2
        // Predicated region
        $region37: #{tpu_custom_call.1} parent=23 // pred_check
          _
        $region38: #{tpu_custom_call.1} parent=23 // pred_check_branch
          %216 = sbr.rel target = $region40
        $region39: #{tpu_custom_call.1} parent=23 // pred_region
          %217 = sst [smem:[#allocation14]] [#allocation19]
          %218 = sst [smem:[#allocation15]] [#allocation18]
        $region40: #{tpu_custom_call.1} parent=23 // pred_fallthru
          _
        %220 = shalt.err (0)
        %s222 = sshll.u32 %s213, 4
        %s223 = int_to_ptr.vmem [resolvable:$true] %s222
        %225 = dma.hbm_to_vmem [thread:$0]  %s212, 16, %s223, %s214
        %s226 = sadd.s32 %s177, 3
        %s227 = sld [smem:[#allocation5 + %s226]]
        %s228 = smul.addr %s227, 16
        %s229 = scalar_lea.hbm %s1, %s228
        %s230 = scalar_lea.vmem [#allocation2], 3
        %s231 = scalar_lea.sflag [#allocation3], 3
        // Predicated region
        $region41: #{tpu_custom_call.1} parent=23 // pred_check
          _
        $region42: #{tpu_custom_call.1} parent=23 // pred_check_branch
          %233 = sbr.rel target = $region44
        $region43: #{tpu_custom_call.1} parent=23 // pred_region
          %234 = sst [smem:[#allocation14]] [#allocation21]
          %235 = sst [smem:[#allocation15]] [#allocation20]
        $region44: #{tpu_custom_call.1} parent=23 // pred_fallthru
          _
        %237 = shalt.err (0)
        %s239 = sshll.u32 %s230, 4
        %s240 = int_to_ptr.vmem [resolvable:$true] %s239
        %242 = dma.hbm_to_vmem [thread:$0]  %s229, 16, %s240, %s231
        %s243 = sadd.s32 %s177, 4
        %s244 = sld [smem:[#allocation5 + %s243]]
        %s245 = smul.addr %s244, 16
        %s246 = scalar_lea.hbm %s1, %s245
        %s247 = scalar_lea.vmem [#allocation2], 4
        %s248 = scalar_lea.sflag [#allocation3], 4
        // Predicated region
        $region45: #{tpu_custom_call.1} parent=23 // pred_check
          _
        $region46: #{tpu_custom_call.1} parent=23 // pred_check_branch
          %250 = sbr.rel target = $region48
        $region47: #{tpu_custom_call.1} parent=23 // pred_region
          %251 = sst [smem:[#allocation14]] [#allocation23]
          %252 = sst [smem:[#allocation15]] [#allocation22]
        $region48: #{tpu_custom_call.1} parent=23 // pred_fallthru
          _
        %254 = shalt.err (0)
        %s256 = sshll.u32 %s247, 4
        %s257 = int_to_ptr.vmem [resolvable:$true] %s256
        %259 = dma.hbm_to_vmem [thread:$0]  %s246, 16, %s257, %s248
        %s260 = sadd.s32 %s177, 5
        %s261 = sld [smem:[#allocation5 + %s260]]
        %s262 = smul.addr %s261, 16
        %s263 = scalar_lea.hbm %s1, %s262
        %s264 = scalar_lea.vmem [#allocation2], 5
        %s265 = scalar_lea.sflag [#allocation3], 5
        // Predicated region
        $region49: #{tpu_custom_call.1} parent=23 // pred_check
          _
        $region50: #{tpu_custom_call.1} parent=23 // pred_check_branch
          %267 = sbr.rel target = $region52
        $region51: #{tpu_custom_call.1} parent=23 // pred_region
          %268 = sst [smem:[#allocation14]] [#allocation25]
          %269 = sst [smem:[#allocation15]] [#allocation24]
        $region52: #{tpu_custom_call.1} parent=23 // pred_fallthru
          _
        %271 = shalt.err (0)
        %s273 = sshll.u32 %s264, 4
        %s274 = int_to_ptr.vmem [resolvable:$true] %s273
        %276 = dma.hbm_to_vmem [thread:$0]  %s263, 16, %s274, %s265
        %s277 = sadd.s32 %s177, 6
        %s278 = sld [smem:[#allocation5 + %s277]]
        %s279 = smul.addr %s278, 16
        %s280 = scalar_lea.hbm %s1, %s279
        %s281 = scalar_lea.vmem [#allocation2], 6
        %s282 = scalar_lea.sflag [#allocation3], 6
        // Predicated region
        $region53: #{tpu_custom_call.1} parent=23 // pred_check
          _
        $region54: #{tpu_custom_call.1} parent=23 // pred_check_branch
          %284 = sbr.rel target = $region56
        $region55: #{tpu_custom_call.1} parent=23 // pred_region
          %285 = sst [smem:[#allocation14]] [#allocation27]
          %286 = sst [smem:[#allocation15]] [#allocation26]
        $region56: #{tpu_custom_call.1} parent=23 // pred_fallthru
          _
        %288 = shalt.err (0)
        %s290 = sshll.u32 %s281, 4
        %s291 = int_to_ptr.vmem [resolvable:$true] %s290
        %293 = dma.hbm_to_vmem [thread:$0]  %s280, 16, %s291, %s282
        %s294 = sadd.s32 %s177, 7
        %s295 = sld [smem:[#allocation5 + %s294]]
        %s296 = smul.addr %s295, 16
        %s297 = scalar_lea.hbm %s1, %s296
        %s298 = scalar_lea.vmem [#allocation2], 7
        %s299 = scalar_lea.sflag [#allocation3], 7
        // Predicated region
        $region57: #{tpu_custom_call.1} parent=23 // pred_check
          _
        $region58: #{tpu_custom_call.1} parent=23 // pred_check_branch
          %301 = sbr.rel target = $region60
        $region59: #{tpu_custom_call.1} parent=23 // pred_region
          %302 = sst [smem:[#allocation14]] [#allocation29]
          %303 = sst [smem:[#allocation15]] [#allocation28]
        $region60: #{tpu_custom_call.1} parent=23 // pred_fallthru
          _
        %305 = shalt.err (0)
        %s307 = sshll.u32 %s298, 4
        %s308 = int_to_ptr.vmem [resolvable:$true] %s307
        %310 = dma.hbm_to_vmem [thread:$0]  %s297, 16, %s308, %s299
        %s311 = smul.u32 1, 1
        %s312 = sshll.u32 %s311, 4
        %313 = dma.done [#allocation3], %s312
        %s314 = sshll.u32 %s311, 4
        %315 = dma.done %s197, %s314
        %s316 = sshll.u32 %s311, 4
        %317 = dma.done %s214, %s316
        %s318 = sshll.u32 %s311, 4
        %319 = dma.done %s231, %s318
        %s320 = sshll.u32 %s311, 4
        %321 = dma.done %s248, %s320
        %s322 = sshll.u32 %s311, 4
        %323 = dma.done %s265, %s322
        %s324 = sshll.u32 %s311, 4
        %325 = dma.done %s282, %s324
        %s326 = sshll.u32 %s311, 4
        %327 = dma.done %s299, %s326
        %v328 = vld [vmem:[#allocation2] sm:$0xff]
        %329 = vst [vmem:[%s167] sm:$0xff] %v328
        %v330 = vmul.f32 %v328, 5.656854
        %v331 = vld [vmem:[#allocation6] sm:$0xff]
        %v332 = vadd.f32 %v330, %v331
        %333 = vst [vmem:[%s174] sm:$0xff] %v332
        %s334 = sand.u32 %s75, 1
        %s335 = scalar_lea.sflag [#allocation8], %s334
        %s336 = sand.u32 %s75, 1
        %s337 = smul.addr %s336, 8
        %s338 = scalar_lea.vmem [#allocation9], %s337
        %s339 = sand.u32 %s103, 1
        %s340 = scalar_lea.sflag [#allocation11], %s339
        %s341 = sand.u32 %s103, 1
        %s342 = smul.addr %s341, 8
        %s343 = scalar_lea.vmem [#allocation10], %s342
        // Predicated region
        $region61: #{tpu_custom_call.1} parent=23 // pred_check
          %p344 = pneg %p85
        $region62: #{tpu_custom_call.1} parent=23 // pred_check_branch
          %346 = sbr.rel (%p344) target = $region64
        $region63: #{tpu_custom_call.1} parent=23 // pred_region
          %s348 = ssub.s32 128, 128
          %349 = vsyncadd %s335, %s348
          %s350 = sadd.s32 %s32, %s31
          %s351 = smul.addr %s350, 128
          %s352 = scalar_lea.hbm %s3, %s351
          %s354 = sshll.u32 %s338, 4
          %s355 = int_to_ptr.vmem [resolvable:$true] %s354
          %357 = dma.vmem_to_hbm [thread:$0]  %s355, 128, %s352, %s335
        $region64: #{tpu_custom_call.1} parent=23 // pred_fallthru
          _
        // Predicated region
        $region65: #{tpu_custom_call.1} parent=23 // pred_check
          %p358 = pneg %p113
        $region66: #{tpu_custom_call.1} parent=23 // pred_check_branch
          %360 = sbr.rel (%p358) target = $region68
        $region67: #{tpu_custom_call.1} parent=23 // pred_region
          %s362 = ssub.s32 128, 128
          %363 = vsyncadd %s340, %s362
          %s364 = sadd.s32 %s32, %s31
          %s365 = smul.addr %s364, 128
          %s366 = scalar_lea.hbm %s4, %s365
          %s368 = sshll.u32 %s343, 4
          %s369 = int_to_ptr.vmem [resolvable:$true] %s368
          %371 = dma.vmem_to_hbm [thread:$0]  %s369, 128, %s366, %s340
        $region68: #{tpu_custom_call.1} parent=23 // pred_fallthru
          _
      $region24: #{tpu_custom_call.1} parent=5 // pred_fallthru
        _
      %p372 = scmp.le.s32.totalorder 2, %s22
      // Predicated region
      $region69: #{tpu_custom_call.1} parent=5 // pred_check
        %p373 = pneg %p372
      $region70: #{tpu_custom_call.1} parent=5 // pred_check_branch
        %375 = sbr.rel (%p373) target = $region72
      $region71: #{tpu_custom_call.1} parent=5 // pred_region
        %s376 = ssub.s32 %s22, 2
        // Predicated region
        $region73: #{tpu_custom_call.1} parent=71 // pred_check
          %p377 = pneg %p91
        $region74: #{tpu_custom_call.1} parent=71 // pred_check_branch
          %379 = sbr.rel (%p377) target = $region76
        $region75: #{tpu_custom_call.1} parent=71 // pred_region
          %s380 = sand.u32 %s76, 1
          %s381 = scalar_lea.sflag [#allocation8], %s380
          %s382 = sand.u32 %s76, 1
          %s383 = smul.addr %s382, 8
          %s384 = scalar_lea.vmem [#allocation9], %s383
          %385 = dma.done %s381, 128
        $region76: #{tpu_custom_call.1} parent=71 // pred_fallthru
          _
        // Predicated region
        $region77: #{tpu_custom_call.1} parent=71 // pred_check
          %p386 = pneg %p119
        $region78: #{tpu_custom_call.1} parent=71 // pred_check_branch
          %388 = sbr.rel (%p386) target = $region80
        $region79: #{tpu_custom_call.1} parent=71 // pred_region
          %s389 = sand.u32 %s104, 1
          %s390 = scalar_lea.sflag [#allocation11], %s389
          %s391 = sand.u32 %s104, 1
          %s392 = smul.addr %s391, 8
          %s393 = scalar_lea.vmem [#allocation10], %s392
          %394 = dma.done %s390, 128
        $region80: #{tpu_custom_call.1} parent=71 // pred_fallthru
          _
      $region72: #{tpu_custom_call.1} parent=5 // pred_fallthru
        _
    $region6: #{tpu_custom_call.1} parent=1 // loop_footer
      %s26 = sadd.s32 1, %s22
    $region7: #{tpu_custom_call.1} parent=1 // loop_footer_branch
      %21 = sbr.rel target = $region3
    $region8: #{tpu_custom_call.1} parent=1 // loop_exit
      _
    %395 = vsyncpa [#allocation7], 1
    %s396 = scalar_lea.sflag [#allocation7], 1
    %397 = vsyncpa %s396, 1
    %398 = vsyncpa [#allocation8], 1
    %s399 = scalar_lea.sflag [#allocation8], 1
    %400 = vsyncpa %s399, 1
    %401 = vsyncpa [#allocation11], 1
    %s402 = scalar_lea.sflag [#allocation11], 1
    %403 = vsyncpa %s402, 1
  %404 = vsyncmov [#allocation3]
  %s405 = vpop.sfrf %404
  %p406 = scmp.eq.s32.totalorder %s405, 0
  %p407 = pneg %p406
  %409 = shalt.err (%p407)
  %s410 = scalar_lea.sflag [#allocation3], 1
  %411 = vsyncmov %s410
  %s412 = vpop.sfrf %411
  %p413 = scmp.eq.s32.totalorder %s412, 0
  %p414 = pneg %p413
  %416 = shalt.err (%p414)
  %s417 = scalar_lea.sflag [#allocation3], 2
  %418 = vsyncmov %s417
  %s419 = vpop.sfrf %418
  %p420 = scmp.eq.s32.totalorder %s419, 0
  %p421 = pneg %p420
  %423 = shalt.err (%p421)
  %s424 = scalar_lea.sflag [#allocation3], 3
  %425 = vsyncmov %s424
  %s426 = vpop.sfrf %425
  %p427 = scmp.eq.s32.totalorder %s426, 0
  %p428 = pneg %p427
  %430 = shalt.err (%p428)
  %s431 = scalar_lea.sflag [#allocation3], 4
  %432 = vsyncmov %s431
  %s433 = vpop.sfrf %432
  %p434 = scmp.eq.s32.totalorder %s433, 0
  %p435 = pneg %p434
  %437 = shalt.err (%p435)
  %s438 = scalar_lea.sflag [#allocation3], 5
  %439 = vsyncmov %s438
  %s440 = vpop.sfrf %439
  %p441 = scmp.eq.s32.totalorder %s440, 0
  %p442 = pneg %p441
  %444 = shalt.err (%p442)
  %s445 = scalar_lea.sflag [#allocation3], 6
  %446 = vsyncmov %s445
  %s447 = vpop.sfrf %446
  %p448 = scmp.eq.s32.totalorder %s447, 0
  %p449 = pneg %p448
  %451 = shalt.err (%p449)
  %s452 = scalar_lea.sflag [#allocation3], 7
  %453 = vsyncmov %s452
  %s454 = vpop.sfrf %453
  %p455 = scmp.eq.s32.totalorder %s454, 0
  %p456 = pneg %p455
  %458 = shalt.err (%p456)

</llo_original>
